<compile_context>
chip_gen: v5e
topology: v5e:2x2
jax: 0.10.0
libtpu: 0.0.40
codegen_flags: <defaults>
</compile_context>

<pallas_src>
import jax
import jax.numpy as jnp
from jax.experimental import pallas as pl
from jax.experimental.pallas import tpu as pltpu


# Split large copies into a few concurrent DMAs so several DMA engines can
# overlap; small copies use a single whole-array DMA.
_MAX_DMA_CHUNKS = 4
_CHUNK_THRESHOLD_BYTES = 8 * 1024 * 1024


def _make_dma_copy_kernel(chunk_bounds):
    """Build a kernel that copies x -> out entirely via HBM->HBM DMA.

    `chunk_bounds` is a static list of (start, size) slices along axis 0, or
    [(None, None)] for a single whole-array DMA. No VMEM staging, no grid.
    """

    def kernel(x_hbm, o_hbm, sem):
        copies = []
        for i, (start, size) in enumerate(chunk_bounds):
            if start is None:
                src, dst = x_hbm, o_hbm
            else:
                src = x_hbm.at[pl.ds(start, size)]
                dst = o_hbm.at[pl.ds(start, size)]
            copies.append(pltpu.make_async_copy(src, dst, sem.at[i]))
        # Issue all DMAs first (overlap), then wait on all of them.
        for cp in copies:
            cp.start()
        for cp in copies:
            cp.wait()

    return kernel


def pallas_identity(x):
    """Identity copy of `x` via one Pallas call: direct HBM->HBM DMA."""
    orig_shape = x.shape
    if x.ndim == 0:
        x = jnp.reshape(x, (1,))  # DMA wants at least one dimension.

    nbytes = x.size * jnp.dtype(x.dtype).itemsize
    leading = x.shape[0]

    if nbytes >= _CHUNK_THRESHOLD_BYTES and leading >= 2:
        # Static, equal-ish chunking along the leading dim (2-4 overlapped DMAs).
        n_chunks = min(_MAX_DMA_CHUNKS, leading)
        base, rem = divmod(leading, n_chunks)
        bounds, start = [], 0
        for i in range(n_chunks):
            size = base + (1 if i < rem else 0)
            bounds.append((start, size))
            start += size
    else:
        bounds = [(None, None)]  # one whole-array DMA

    kernel = _make_dma_copy_kernel(bounds)

    y = pl.pallas_call(
        kernel,
        out_shape=jax.ShapeDtypeStruct(x.shape, x.dtype),
        # Raw HBM refs; no BlockSpec tiling, no VMEM staging, no grid.
        in_specs=[pl.BlockSpec(memory_space=pl.ANY)],
        out_specs=pl.BlockSpec(memory_space=pl.ANY),
        scratch_shapes=[pltpu.SemaphoreType.DMA((len(bounds),))],
    )(x)

    if y.shape != orig_shape:
        y = jnp.reshape(y, orig_shape)
    return y


class PrintPallas:
    """JAX/Pallas equivalent of the PyTorch `Print` nn.Module.

    forward: prints f"{txt}{x.shape}" and returns x unchanged.
    """

    def __init__(self, txt="", use_pallas_kernel=True):
        self.txt = txt
        # use_pallas_kernel=False is the recommended zero-cost production path
        # (Print is a pure identity); True routes through the Pallas DMA-copy
        # kernel for parity/testing.
        self.use_pallas_kernel = use_pallas_kernel

    def __call__(self, x):
        # Python-side print of the static shape, matching
        # `print(f'{self.txt}{x.shape}')`. Fires per eager call; once per
        # trace under jit (the shape is static either way).
        print(f"{self.txt}{tuple(x.shape)}")
        if not self.use_pallas_kernel:
            return x
        return pallas_identity(x)


if __name__ == "__main__":
    key = jax.random.PRNGKey(0)
    # Small NCHW-style input consistent with a typical conv-net debug hook.
    x = jax.random.normal(key, (2, 4, 16, 16), dtype=jnp.float32)

    # Pallas DMA-copy path (runs the kernel once).
    mod = PrintPallas(txt="debug: ")
    y = jax.block_until_ready(mod(x))

    assert y.shape == x.shape
    assert y.dtype == x.dtype
    assert bool(jnp.all(y == x))

    # Zero-cost production path (no kernel), same semantics.
    fast = PrintPallas(txt="debug-fast: ", use_pallas_kernel=False)
    y_fast = jax.block_until_ready(fast(x))
    assert y_fast is x

    print("KERNEL_OK")
</pallas_src>

<mosaic_0001>
module attributes {stable_mosaic.version = 11 : i64} {
  func.func @kernel(%arg0: memref<2x4x16x16xf32, #tpu.memory_space<any>>, %arg1: memref<2x4x16x16xf32, #tpu.memory_space<any>>, %arg2: memref<1x!tpu.dma_semaphore, #tpu.memory_space<semaphore_mem>>) attributes {dimension_semantics = [], scalar_prefetch = 0 : i64, scratch_operands = 1 : i64, tpu.core_type = #tpu.core_type<tc>} {
    %c0_i32 = arith.constant 0 : i32
    %0 = tpu.memref_slice %arg2[%c0_i32] : memref<1x!tpu.dma_semaphore, #tpu.memory_space<semaphore_mem>> -> memref<1x!tpu.dma_semaphore, #tpu.memory_space<semaphore_mem>>
    %1 = tpu.memref_squeeze %0 : memref<1x!tpu.dma_semaphore, #tpu.memory_space<semaphore_mem>> -> memref<!tpu.dma_semaphore, #tpu.memory_space<semaphore_mem>>
    tpu.enqueue_dma source(%arg0 : memref<2x4x16x16xf32, #tpu.memory_space<any>>) target(%arg1 : memref<2x4x16x16xf32, #tpu.memory_space<any>>) target_semaphore(%1 : memref<!tpu.dma_semaphore, #tpu.memory_space<semaphore_mem>>)
    %c0_i32_0 = arith.constant 0 : i32
    %2 = tpu.memref_slice %arg2[%c0_i32_0] : memref<1x!tpu.dma_semaphore, #tpu.memory_space<semaphore_mem>> -> memref<1x!tpu.dma_semaphore, #tpu.memory_space<semaphore_mem>>
    %3 = tpu.memref_squeeze %2 : memref<1x!tpu.dma_semaphore, #tpu.memory_space<semaphore_mem>> -> memref<!tpu.dma_semaphore, #tpu.memory_space<semaphore_mem>>
    tpu.wait_dma2 semaphore(%3 : memref<!tpu.dma_semaphore, #tpu.memory_space<semaphore_mem>>) src(%arg0 : memref<2x4x16x16xf32, #tpu.memory_space<any>>) dst(%arg1 : memref<2x4x16x16xf32, #tpu.memory_space<any>>)
    return
  }
}

</mosaic_0001>

<llo_original>
// kernel: tpu_custom_call.1
$region0: #{tpu_custom_call.1}
  #allocation0 [shape = 'u32[]', space=smem, size = 0x4, offset = 0x4, fixed_abs, tag = 'smem constant byte address 0x4 - core index']
  #allocation1 [shape = 'u32[72,128]{1,0:T(1,128)}', space=vmem, size = 0x9000, scoped, tag = 'internal scratch']
  #allocation2 [shape = 's32[1]{0}', space=sflag, size = 0x4, scoped, tag = 'scratch operand']
  #allocation3 [shape = 's32[]', space=sflag, size = 0x4, offset = 0, fixed_abs, tag = 'sflag constant byte address 0x0 - dummy sync flag']
  #allocation4 [shape = 'u32[0]{0}', space=smem, size = 0, offset = 0, fixed_abs, tag = 'smem constant byte address 0x0 - null']
  %s0 = inlined_call_operand.hbm [shape: f32[2,4,16,16], index: 0, kind: input, shape index: {}]
  %s1 = inlined_call_operand.hbm [shape: f32[2,4,16,16], index: 1, kind: output, shape index: {}]
  %s2 = sld [smem:[#allocation0]]
  $region2: #{tpu_custom_call.1} parent=0
    _
  %s4 = ssub.s32 1, %s2
  %s5 = scalar_select 0, %s4, %s2
  %s7 = sshll.u32 1, 14
  %s8 = sxor.u32 4294967295, %s7
  %s10 = sshll.u32 %s0, 4
  %s11 = int_to_ptr.hbm [resolvable:$true] %s10
  %s12 = sshll.u32 %s1, 4
  %s13 = int_to_ptr.hbm [resolvable:$true] %s12
  %16 = dma.general %s11, 2048, %s13, [#allocation2], [#allocation3], [#allocation4], 0, 0
  %s17 = smul.u32 2, 4
  %s18 = smul.u32 %s17, 16
  %s19 = smul.u32 %s18, 1
  %s20 = sshll.u32 %s19, 4
  %21 = dma.done [#allocation2], %s20
  %22 = vsyncmov [#allocation2]
  %s23 = vpop.sfrf %22
  %p24 = scmp.eq.s32.totalorder %s23, 0
  %p25 = pneg %p24
  %27 = shalt.err (%p25)

</llo_original>
